<compile_context>
chip_gen: v7x
topology: tpu7x:2x2x1
jax: 0.10.0
libtpu: 0.0.40
codegen_flags: <defaults>
</compile_context>

<pallas_src>
import functools
import math

import jax
import jax.numpy as jnp
from jax import lax
from jax.experimental import pallas as pl
from jax.experimental.pallas import tpu as pltpu

_MIB = 1024 * 1024


def _round_up(x, m):
    return ((x + m - 1) // m) * m


def _chip_info():
    """Best-effort chip-generation / VMEM query (safe fallbacks)."""
    kind = ""
    try:
        kind = jax.devices()[0].device_kind.lower()
    except Exception:
        pass
    is_v7 = ("v7" in kind) or ("7x" in kind)
    is_v5e = ("v5 lite" in kind) or ("v5lite" in kind) or ("v5e" in kind)
    # bf16 VPU/EUP exists on v6e / v7x; v5e (and older) keep f32 elementwise math.
    bf16_elt = ("v6" in kind) or is_v7
    try:
        phys_vmem = int(pltpu.get_tpu_info().vmem_capacity_bytes)
    except Exception:
        phys_vmem = (64 if is_v7 else 128) * _MIB
    return is_v7, is_v5e, bf16_elt, phys_vmem


def _attention_kernel(hidden_ref, enc_ref, wh_ref, we_ref, b_ref, v_ref, out_ref,
                      *, dec_chunk, elt_dtype):
    # hidden_ref : (TB, dec)        f32  decoder hidden block
    # enc_ref    : (S, TB, enc2)    f32  encoder outputs block (original src-major layout)
    # wh_ref     : (dec, dec_pad)   bf16 attn weight (hidden columns), transposed
    # we_ref     : (enc2, dec_pad)  bf16 attn weight (encoder columns), transposed
    # b_ref      : (1, dec_pad)     f32  attn bias (zero-padded)
    # v_ref      : (1, dec_pad)     f32  v weight (zero-padded, no bias)
    # out_ref    : (TB, S)          f32  softmax over src
    sl, tb, enc2 = enc_ref.shape
    dec_pad = wh_ref.shape[1]
    n_chunks = dec_pad // dec_chunk

    # bf16 MXU operands, f32 accumulation; casts happen in VMEM (no wrapper HBM pass).
    h_bf = hidden_ref[...].astype(jnp.bfloat16)                        # (TB, dec)
    enc2d = enc_ref[...].astype(jnp.bfloat16).reshape(sl * tb, enc2)   # (S*TB, enc2)

    def chunk_scores(start):
        # one <=128-lane slice of the dec dimension -> bounded live intermediates
        wh_c = wh_ref[:, pl.ds(start, dec_chunk)]                      # (dec, C)  bf16
        we_c = we_ref[:, pl.ds(start, dec_chunk)]                      # (enc2, C) bf16
        b_c = b_ref[:, pl.ds(start, dec_chunk)]                        # (1, C)    f32
        v_c = v_ref[:, pl.ds(start, dec_chunk)]                        # (1, C)    f32
        eh = jnp.dot(h_bf, wh_c, preferred_element_type=jnp.float32) + b_c   # (TB, C)
        ee = jnp.dot(enc2d, we_c, preferred_element_type=jnp.float32)        # (S*TB, C)
        pre = ee.reshape(sl, tb, dec_chunk) + eh[None, :, :]                 # f32
        # tanh / v-multiply in bf16 on v6e/v7x (bf16 EUP/VPU), f32 on v5e.
        energy = jnp.tanh(pre.astype(elt_dtype))
        prod = energy * v_c.astype(elt_dtype)
        # TODO(synk): if the bundle dump shows the XLU saturating on this lane reduce,
        # move the v-dot onto the (underfilled) MXU instead.
        return jnp.sum(prod.astype(jnp.float32), axis=-1)              # (S, TB) f32

    if n_chunks == 1:
        att = chunk_scores(0)
    else:
        def body(c, acc):
            return acc + chunk_scores(pl.multiple_of(c * dec_chunk, dec_chunk))
        att = lax.fori_loop(0, n_chunks, body,
                            jnp.zeros((sl, tb), jnp.float32),
                            unroll=True if n_chunks <= 8 else 2)

    # softmax over src: transpose only the small (S, TB) score tile, then reduce lanes.
    att_t = att.T                                                      # (TB, S) f32
    m = jnp.max(att_t, axis=-1, keepdims=True)
    e = jnp.exp(att_t - m)
    s = jnp.sum(e, axis=-1, keepdims=True)
    out_ref[...] = (e * (1.0 / s)).astype(out_ref.dtype)               # exact normalization


def attention_forward(hidden, encoder_outputs, w_attn, b_attn, w_v):
    """hidden: (B, dec_hid); encoder_outputs: (src_len, B, 2*enc_hid).

    w_attn: (dec_hid, dec_hid + 2*enc_hid)  (cat order: hidden, encoder_outputs)
    b_attn: (dec_hid,), w_v: (1, dec_hid).
    Returns (B, src_len) softmax attention weights (float32).
    """
    src_len, batch, enc2 = encoder_outputs.shape
    dec_hid = hidden.shape[1]
    assert src_len >= 1, "softmax over an empty src axis is undefined"

    is_v7, is_v5e, bf16_elt, phys_vmem = _chip_info()
    elt_dtype = jnp.bfloat16 if bf16_elt else jnp.float32

    # dec chunking: bound the live (S, TB, C) tanh intermediate to <=128 lanes per chunk.
    dec_chunk = dec_hid if dec_hid <= 128 else 128
    dec_pad = _round_up(dec_hid, dec_chunk)

    # ---- small weight prep only (negligible HBM); the big encoder tensor is fed as-is ----
    wh_t = w_attn[:, :dec_hid].T                                  # (dec, dec)  hidden cols
    we_t = w_attn[:, dec_hid:].T                                  # (enc2, dec) encoder cols
    b2d = jnp.asarray(b_attn, jnp.float32).reshape(1, dec_hid)
    v2d = jnp.asarray(w_v, jnp.float32).reshape(1, dec_hid)
    if dec_pad != dec_hid:
        pad = dec_pad - dec_hid                                   # zero-padded dec columns
        wh_t = jnp.pad(wh_t, ((0, 0), (0, pad)))                  # contribute exactly 0
        we_t = jnp.pad(we_t, ((0, 0), (0, pad)))
        b2d = jnp.pad(b2d, ((0, 0), (0, pad)))
        v2d = jnp.pad(v2d, ((0, 0), (0, pad)))
    wh_t = wh_t.astype(jnp.bfloat16)
    we_t = we_t.astype(jnp.bfloat16)

    # tiny batches: pad batch to one full 8-row sublane block (cheap at this size);
    # larger batches rely on Pallas partial edge blocks (OOB rows are discarded).
    if batch < 8:
        hidden = jnp.pad(hidden, ((0, 8 - batch), (0, 0)))
        encoder_outputs = jnp.pad(encoder_outputs, ((0, 0), (0, 8 - batch), (0, 0)))
        b_pad = 8
    else:
        b_pad = batch

    # ---- VMEM footprint model (blocks + in-kernel temporaries, (8,128)-padded) ----
    elt_bytes = 2 if bf16_elt else 4
    e_lp = _round_up(enc2, 128)
    s_lp = _round_up(src_len, 128)
    d_lp = _round_up(dec_hid, 128)
    c_lp = _round_up(dec_chunk, 128)
    dp_lp = _round_up(dec_pad, 128)

    per_row = 0                                                   # bytes per batch row
    per_row += 2 * src_len * e_lp * 4                             # enc block (f32, 2 bufs)
    per_row += 2 * d_lp * 4                                       # hidden block (2 bufs)
    per_row += 2 * s_lp * 4                                       # output block (2 bufs)
    per_row += src_len * e_lp * (2 + 2)                           # bf16 copy (+ staging slack)
    per_row += src_len * c_lp * (4 + 4 + elt_bytes + elt_bytes)   # ee / pre / energy / prod
    per_row += _round_up(src_len, 8) * 4 * 2                      # (S, TB) score accumulator
    per_row += s_lp * 4 * 3                                       # transposed scores / exp / out

    fixed = 0                                                     # grid-invariant bytes
    fixed += 2 * (_round_up(dec_hid, 8) + _round_up(enc2, 8)) * dp_lp * 2   # wh_t, we_t (2 bufs)
    fixed += 2 * 2 * 8 * dp_lp * 4                                          # bias, v (2 bufs)
    fixed += 2 * _round_up(src_len, 8) * 128 * 4                            # lane-pad slack
    fixed += 2 * _MIB                                                       # misc headroom
    # TODO(synk): pipeline_mode=pl.Buffered(1) on the grid-invariant weight specs (and
    # Buffered(3) on the encoder spec if xprof shows exposed DMA) to reclaim their 2nd buffer.

    budget = int(phys_vmem * 0.7)                 # ~90 MiB on v5e/v6e, ~45 MiB on v7x
    tile_b = (budget - fixed) // max(per_row, 1)
    tile_b = max(8, min((tile_b // 8) * 8, _round_up(b_pad, 8), 1024))

    # give every TensorCore >=2 pipelined grid steps when the batch allows it
    # (v7x has 2 TCs -> aim for >=4 steps total; single-TC chips -> >=2).
    steps_target = 4 if is_v7 else 2
    if _round_up(b_pad, 8) // 8 >= steps_target:
        tile_b = min(tile_b, _round_up(-(-b_pad // steps_target), 8))
    grid = ((b_pad + tile_b - 1) // tile_b,)

    footprint = fixed + tile_b * per_row
    vmem_limit = int(min(phys_vmem * 0.9, max(footprint + 16 * _MIB, 48 * _MIB)))
    # TODO(synk): chunk the src dimension (2nd grid axis + (TB, S) score scratch) when a
    # full-src encoder block alone exceeds the per-step VMEM budget (very long sequences).

    kernel = functools.partial(_attention_kernel, dec_chunk=dec_chunk, elt_dtype=elt_dtype)

    out = pl.pallas_call(
        kernel,
        out_shape=jax.ShapeDtypeStruct((b_pad, src_len), jnp.float32),
        grid_spec=pltpu.PrefetchScalarGridSpec(
            num_scalar_prefetch=0,
            grid=grid,
            in_specs=[
                pl.BlockSpec((tile_b, dec_hid), lambda b: (b, 0)),           # hidden (B, dec)
                pl.BlockSpec((src_len, tile_b, enc2), lambda b: (0, b, 0)),  # encoder, as-is
                pl.BlockSpec((dec_hid, dec_pad), lambda b: (0, 0)),          # wh_t
                pl.BlockSpec((enc2, dec_pad), lambda b: (0, 0)),             # we_t
                pl.BlockSpec((1, dec_pad), lambda b: (0, 0)),                # bias
                pl.BlockSpec((1, dec_pad), lambda b: (0, 0)),                # v
            ],
            out_specs=pl.BlockSpec((tile_b, src_len), lambda b: (b, 0)),
        ),
        compiler_params=pltpu.CompilerParams(
            dimension_semantics=("parallel",),
            vmem_limit_bytes=vmem_limit,
        ),
    )(hidden, encoder_outputs, wh_t, we_t, b2d, v2d)

    return out[:batch] if b_pad != batch else out


def _reference(hidden, encoder_outputs, w_attn, b_attn, w_v):
    src_len, batch, _ = encoder_outputs.shape
    h = jnp.repeat(hidden[:, None, :], src_len, axis=1)             # (B, src, dec)
    enc = jnp.transpose(encoder_outputs, (1, 0, 2))                 # (B, src, enc2)
    x = jnp.concatenate([h, enc], axis=2)                           # (B, src, dec+enc2)
    energy = jnp.tanh(jnp.einsum("bsk,dk->bsd", x, w_attn) + b_attn)
    att = jnp.einsum("bsd,od->bso", energy, w_v)[..., 0]            # (B, src)
    return jax.nn.softmax(att, axis=1)


if __name__ == "__main__":
    # small shapes consistent with the module
    enc_hid_dim = 16
    dec_hid_dim = 32
    batch = 2
    src_len = 8
    enc2 = enc_hid_dim * 2

    key = jax.random.PRNGKey(0)
    k_h, k_e, k_w, k_b, k_v = jax.random.split(key, 5)

    hidden = jax.random.normal(k_h, (batch, dec_hid_dim), jnp.float32)
    encoder_outputs = jax.random.normal(k_e, (src_len, batch, enc2), jnp.float32)

    # deterministic PyTorch-Linear-style init; cat order is (hidden, encoder_outputs)
    fan_in_attn = enc2 + dec_hid_dim
    bound_attn = 1.0 / math.sqrt(fan_in_attn)
    w_attn = jax.random.uniform(k_w, (dec_hid_dim, fan_in_attn), jnp.float32,
                                -bound_attn, bound_attn)
    b_attn = jax.random.uniform(k_b, (dec_hid_dim,), jnp.float32,
                                -bound_attn, bound_attn)
    bound_v = 1.0 / math.sqrt(dec_hid_dim)
    w_v = jax.random.uniform(k_v, (1, dec_hid_dim), jnp.float32, -bound_v, bound_v)

    out = attention_forward(hidden, encoder_outputs, w_attn, b_attn, w_v)
    out = jax.block_until_ready(out)

    ref = _reference(hidden, encoder_outputs, w_attn, b_attn, w_v)
    assert out.shape == (batch, src_len)
    # bf16 MXU operands (+ bf16 tanh on v6e/v7x) -> compare with a loosened tolerance
    assert jnp.allclose(out, ref, atol=2e-2, rtol=2e-2), "mismatch vs reference"
    assert jnp.allclose(jnp.sum(out, axis=1), 1.0, atol=1e-2), "softmax rows must sum to 1"

    print("KERNEL_OK")
</pallas_src>

<mosaic_0001>
module attributes {stable_mosaic.version = 11 : i64} {
  func.func @_attention_kernel(%arg0: i32, %arg1: memref<8x32xf32, #tpu.memory_space<vmem>>, %arg2: memref<8x8x32xf32, #tpu.memory_space<vmem>>, %arg3: memref<32x32xbf16, #tpu.memory_space<vmem>>, %arg4: memref<32x32xbf16, #tpu.memory_space<vmem>>, %arg5: memref<1x32xf32, #tpu.memory_space<vmem>>, %arg6: memref<1x32xf32, #tpu.memory_space<vmem>>, %arg7: memref<8x8xf32, #tpu.memory_space<vmem>>) attributes {dimension_semantics = [#tpu.dimension_semantics<parallel>], iteration_bounds = array<i64: 1>, scalar_prefetch = 0 : i64, scratch_operands = 0 : i64, tpu.core_type = #tpu.core_type<tc>, window_params = [{transform_indices = @transform_0, window_bounds = array<i64: 8, 32>}, {transform_indices = @transform_1, window_bounds = array<i64: 8, 8, 32>}, {pipeline_mode = #tpu.pipeline_mode<synchronous>, transform_indices = @transform_2, window_bounds = array<i64: 32, 32>}, {pipeline_mode = #tpu.pipeline_mode<synchronous>, transform_indices = @transform_3, window_bounds = array<i64: 32, 32>}, {pipeline_mode = #tpu.pipeline_mode<synchronous>, transform_indices = @transform_4, window_bounds = array<i64: 1, 32>}, {pipeline_mode = #tpu.pipeline_mode<synchronous>, transform_indices = @transform_5, window_bounds = array<i64: 1, 32>}, {transform_indices = @transform_6, window_bounds = array<i64: 8, 8>}]} {
    %c0 = arith.constant 0 : index
    %c0_0 = arith.constant 0 : index
    %0 = vector.load %arg1[%c0, %c0_0] : memref<8x32xf32, #tpu.memory_space<vmem>>, vector<8x32xf32>
    %1 = arith.truncf %0 : vector<8x32xf32> to vector<8x32xbf16>
    %c0_1 = arith.constant 0 : index
    %c0_2 = arith.constant 0 : index
    %c0_3 = arith.constant 0 : index
    %2 = vector.load %arg2[%c0_1, %c0_2, %c0_3] : memref<8x8x32xf32, #tpu.memory_space<vmem>>, vector<8x8x32xf32>
    %3 = arith.truncf %2 : vector<8x8x32xf32> to vector<8x8x32xbf16>
    %4 = vector.shape_cast %3 : vector<8x8x32xbf16> to vector<64x32xbf16>
    %c0_4 = arith.constant 0 : index
    %c0_5 = arith.constant 0 : index
    %5 = vector.load %arg3[%c0_4, %c0_5] : memref<32x32xbf16, #tpu.memory_space<vmem>>, vector<32x32xbf16>
    %c0_6 = arith.constant 0 : index
    %c0_7 = arith.constant 0 : index
    %6 = vector.load %arg4[%c0_6, %c0_7] : memref<32x32xbf16, #tpu.memory_space<vmem>>, vector<32x32xbf16>
    %c0_8 = arith.constant 0 : index
    %c0_9 = arith.constant 0 : index
    %7 = vector.load %arg5[%c0_8, %c0_9] : memref<1x32xf32, #tpu.memory_space<vmem>>, vector<1x32xf32>
    %c0_10 = arith.constant 0 : index
    %c0_11 = arith.constant 0 : index
    %8 = vector.load %arg6[%c0_10, %c0_11] : memref<1x32xf32, #tpu.memory_space<vmem>>, vector<1x32xf32>
    %cst = arith.constant dense<0.000000e+00> : vector<8x32xf32>
    %9 = tpu.matmul %1, %5, %cst {dimension_numbers = #tpu.dot_dimension_numbers<[1], [0], [0], [1], [0, 0, 1, 1], [], []>} : vector<8x32xbf16>, vector<32x32xbf16>, vector<8x32xf32> -> vector<8x32xf32>
    %10 = vector.broadcast %7 : vector<1x32xf32> to vector<8x32xf32>
    %11 = arith.addf %9, %10 : vector<8x32xf32>
    %cst_12 = arith.constant dense<0.000000e+00> : vector<64x32xf32>
    %12 = tpu.matmul %4, %6, %cst_12 {dimension_numbers = #tpu.dot_dimension_numbers<[1], [0], [0], [1], [0, 0, 1, 1], [], []>} : vector<64x32xbf16>, vector<32x32xbf16>, vector<64x32xf32> -> vector<64x32xf32>
    %13 = vector.shape_cast %12 : vector<64x32xf32> to vector<8x8x32xf32>
    %14 = vector.shape_cast %11 : vector<8x32xf32> to vector<1x8x32xf32>
    %15 = vector.broadcast %14 : vector<1x8x32xf32> to vector<8x8x32xf32>
    %16 = arith.addf %13, %15 : vector<8x8x32xf32>
    %17 = math.tanh %16 : vector<8x8x32xf32>
    %18 = vector.shape_cast %8 : vector<1x32xf32> to vector<1x1x32xf32>
    %19 = vector.broadcast %18 : vector<1x1x32xf32> to vector<8x8x32xf32>
    %20 = arith.mulf %17, %19 : vector<8x8x32xf32>
    %cst_13 = arith.constant dense<0.000000e+00> : vector<8x8xf32>
    %21 = vector.multi_reduction <add>, %20, %cst_13 [2] : vector<8x8x32xf32> to vector<8x8xf32>
    %22 = tpu.transpose %21, [1, 0] : vector<8x8xf32> -> vector<8x8xf32>
    %cst_14 = arith.constant dense<0xFF800000> : vector<8xf32>
    %23 = vector.multi_reduction <maximumf>, %22, %cst_14 [1] : vector<8x8xf32> to vector<8xf32>
    %24 = vector.shape_cast %23 : vector<8xf32> to vector<8x1xf32>
    %25 = vector.broadcast %24 : vector<8x1xf32> to vector<8x8xf32>
    %26 = arith.subf %22, %25 : vector<8x8xf32>
    %27 = math.exp %26 : vector<8x8xf32>
    %cst_15 = arith.constant dense<0.000000e+00> : vector<8xf32>
    %28 = vector.multi_reduction <add>, %27, %cst_15 [1] : vector<8x8xf32> to vector<8xf32>
    %29 = vector.shape_cast %28 : vector<8xf32> to vector<8x1xf32>
    %cst_16 = arith.constant 1.000000e+00 : f32
    %30 = vector.broadcast %cst_16 : f32 to vector<8x1xf32>
    %31 = arith.divf %30, %29 : vector<8x1xf32>
    %32 = vector.broadcast %31 : vector<8x1xf32> to vector<8x8xf32>
    %33 = arith.mulf %27, %32 : vector<8x8xf32>
    %c0_17 = arith.constant 0 : index
    %c0_18 = arith.constant 0 : index
    %34 = vector.load %arg7[%c0_17, %c0_18] : memref<8x8xf32, #tpu.memory_space<vmem>>, vector<8x8xf32>
    tpu.vector_store %arg7[%c0_17, %c0_18], %33 {strides = array<i32>} : memref<8x8xf32, #tpu.memory_space<vmem>>, vector<8x8xf32>,
    return
  }
  func.func @transform_0(%arg0: i32) -> (i32, i32) {
    %c0_i32 = arith.constant 0 : i32
    %c0_i32_0 = arith.constant 0 : i32
    return %arg0, %c0_i32 : i32, i32
  }
  func.func @transform_1(%arg0: i32) -> (i32, i32, i32) {
    %c0_i32 = arith.constant 0 : i32
    %c0_i32_0 = arith.constant 0 : i32
    %c0_i32_1 = arith.constant 0 : i32
    return %c0_i32, %arg0, %c0_i32_0 : i32, i32, i32
  }
  func.func @transform_2(%arg0: i32) -> (i32, i32) {
    %c0_i32 = arith.constant 0 : i32
    %c0_i32_0 = arith.constant 0 : i32
    %c0_i32_1 = arith.constant 0 : i32
    return %c0_i32, %c0_i32_0 : i32, i32
  }
  func.func @transform_3(%arg0: i32) -> (i32, i32) {
    %c0_i32 = arith.constant 0 : i32
    %c0_i32_0 = arith.constant 0 : i32
    %c0_i32_1 = arith.constant 0 : i32
    return %c0_i32, %c0_i32_0 : i32, i32
  }
  func.func @transform_4(%arg0: i32) -> (i32, i32) {
    %c0_i32 = arith.constant 0 : i32
    %c0_i32_0 = arith.constant 0 : i32
    %c0_i32_1 = arith.constant 0 : i32
    return %c0_i32, %c0_i32_0 : i32, i32
  }
  func.func @transform_5(%arg0: i32) -> (i32, i32) {
    %c0_i32 = arith.constant 0 : i32
    %c0_i32_0 = arith.constant 0 : i32
    %c0_i32_1 = arith.constant 0 : i32
    return %c0_i32, %c0_i32_0 : i32, i32
  }
  func.func @transform_6(%arg0: i32) -> (i32, i32) {
    %c0_i32 = arith.constant 0 : i32
    %c0_i32_0 = arith.constant 0 : i32
    return %arg0, %c0_i32 : i32, i32
  }
}

</mosaic_0001>

<llo_original>
// kernel: tpu_custom_call.1
$region0: #{tpu_custom_call.1}
  #allocation0 [shape = 'u32[]', space=smem, size = 0x4, offset = 0x4, fixed_abs, tag = 'smem constant byte address 0x4 - core index']
  #allocation1 [shape = 'u32[144,128]{1,0:T(1,128)}', space=vmem, size = 0x12000, scoped, tag = 'internal scratch']
  %s0 = inlined_call_operand.hbm [shape: f32[8,32], index: 0, kind: input, shape index: {}]
  %s1 = inlined_call_operand.hbm [shape: f32[8,8,32], index: 1, kind: input, shape index: {}]
  %s2 = inlined_call_operand.hbm [shape: bf16[32,32], index: 2, kind: input, shape index: {}]
  %s3 = inlined_call_operand.hbm [shape: bf16[32,32], index: 3, kind: input, shape index: {}]
  %s4 = inlined_call_operand.vmem [shape: f32[1,32], index: 4, kind: input, shape index: {}]
  %s5 = inlined_call_operand.vmem [shape: f32[1,32], index: 5, kind: input, shape index: {}]
  %s6 = inlined_call_operand.hbm [shape: f32[8,8], index: 6, kind: output, shape index: {}]
  %s7 = sld [smem:[#allocation0]]
  $region50: #{tpu_custom_call.1} parent=0
    _
  %s9 = ssub.s32 1, %s7
  %s10 = scalar_select 0, %s9, %s7
  $region1: #{tpu_custom_call.1} parent=0
    #allocation2 [shape = 'u8[4096]{0}', space=vmem, size = 0x1000, scoped, tag = 'input window, operand 0, single buffered']
    #allocation3 [shape = 's32[1]{0}', space=sflag, size = 0x4, scoped, tag = 'scoped memory for tpu_custom_call.1']
    #allocation4 [shape = 's32[1]{0}', space=sflag, size = 0x4, scoped, tag = 'scoped memory for tpu_custom_call.1']
    #allocation5 [shape = 'u8[32768]{0}', space=vmem, size = 0x8000, scoped, tag = 'input window, operand 1, single buffered']
    #allocation6 [shape = 's32[1]{0}', space=sflag, size = 0x4, scoped, tag = 'scoped memory for tpu_custom_call.1']
    #allocation7 [shape = 'u8[8192]{0}', space=vmem, size = 0x2000, scoped, tag = 'input window, operand 2, single buffered']
    #allocation8 [shape = 'u8[8192]{0}', space=vmem, size = 0x2000, scoped, tag = 'input window, operand 3, single buffered']
    #allocation9 [shape = 's32[1]{0}', space=sflag, size = 0x4, scoped, tag = 'scoped memory for tpu_custom_call.1']
    #allocation10 [shape = 'u8[4096]{0}', space=vmem, size = 0x1000, scoped, tag = 'output window, operand 0, single buffered']
    %11 = vsyncpa [#allocation3], 0
    %12 = vsyncpa [#allocation6], 0
    %13 = vsyncpa [#allocation9], 0
    %14 = vsyncpa [#allocation4], 0
    // Predicated region
    $region2: #{tpu_custom_call.1} parent=1 // pred_check
      _
    $region3: #{tpu_custom_call.1} parent=1 // pred_check_branch
      %16 = sbr.rel (0) target = $region5
    $region4: #{tpu_custom_call.1} parent=1 // pred_region
      %s18 = ssub.s32 128, 128
      %19 = vsyncadd [#allocation3], %s18
      %s21 = sshll.u32 [#allocation2], 4
      %s22 = int_to_ptr.vmem [resolvable:$true] %s21
      %24 = dma.hbm_to_vmem [thread:$0]  %s0, 128, %s22, [#allocation3]
    $region5: #{tpu_custom_call.1} parent=1 // pred_fallthru
      _
    // Predicated region
    $region6: #{tpu_custom_call.1} parent=1 // pred_check
      _
    $region7: #{tpu_custom_call.1} parent=1 // pred_check_branch
      %26 = sbr.rel (0) target = $region9
    $region8: #{tpu_custom_call.1} parent=1 // pred_region
      %s28 = ssub.s32 1024, 1024
      %29 = vsyncadd [#allocation6], %s28
      %s30 = sshll.u32 [#allocation5], 4
      %s31 = int_to_ptr.vmem [resolvable:$true] %s30
      %36 = dma.hbm_to_vmem [thread:$0]  %s1, 1024, %s31, [#allocation6], 128, 128, 8
    $region9: #{tpu_custom_call.1} parent=1 // pred_fallthru
      _
    // Predicated region
    $region10: #{tpu_custom_call.1} parent=1 // pred_check
      _
    $region11: #{tpu_custom_call.1} parent=1 // pred_check_branch
      %38 = sbr.rel (0) target = $region13
    $region12: #{tpu_custom_call.1} parent=1 // pred_region
      %s40 = ssub.s32 256, 256
      %41 = vsyncadd [#allocation6], %s40
      %s42 = sshll.u32 [#allocation7], 4
      %s43 = int_to_ptr.vmem [resolvable:$true] %s42
      %48 = dma.hbm_to_vmem [thread:$0]  %s2, 256, %s43, [#allocation6], 64, 64, 4
    $region13: #{tpu_custom_call.1} parent=1 // pred_fallthru
      _
    // Predicated region
    $region14: #{tpu_custom_call.1} parent=1 // pred_check
      _
    $region15: #{tpu_custom_call.1} parent=1 // pred_check_branch
      %50 = sbr.rel (0) target = $region17
    $region16: #{tpu_custom_call.1} parent=1 // pred_region
      %s52 = ssub.s32 256, 256
      %53 = vsyncadd [#allocation9], %s52
      %s54 = sshll.u32 [#allocation8], 4
      %s55 = int_to_ptr.vmem [resolvable:$true] %s54
      %60 = dma.hbm_to_vmem [thread:$0]  %s3, 256, %s55, [#allocation9], 64, 64, 4
    $region17: #{tpu_custom_call.1} parent=1 // pred_fallthru
      _
    // Predicated region
    $region18: #{tpu_custom_call.1} parent=1 // pred_check
      _
    $region19: #{tpu_custom_call.1} parent=1 // pred_check_branch
      %62 = sbr.rel (0) target = $region21
    $region20: #{tpu_custom_call.1} parent=1 // pred_region
      _
    $region21: #{tpu_custom_call.1} parent=1 // pred_fallthru
      _
    // Predicated region
    $region22: #{tpu_custom_call.1} parent=1 // pred_check
      _
    $region23: #{tpu_custom_call.1} parent=1 // pred_check_branch
      %64 = sbr.rel (0) target = $region25
    $region24: #{tpu_custom_call.1} parent=1 // pred_region
      _
    $region25: #{tpu_custom_call.1} parent=1 // pred_fallthru
      _
    // Predicated region
    $region26: #{tpu_custom_call.1} parent=1 // pred_check
      _
    $region27: #{tpu_custom_call.1} parent=1 // pred_check_branch
      %66 = sbr.rel (0) target = $region29
    $region28: #{tpu_custom_call.1} parent=1 // pred_region
      %67 = dma.done [#allocation3], 128
    $region29: #{tpu_custom_call.1} parent=1 // pred_fallthru
      _
    // Predicated region
    $region30: #{tpu_custom_call.1} parent=1 // pred_check
      _
    $region31: #{tpu_custom_call.1} parent=1 // pred_check_branch
      %69 = sbr.rel (0) target = $region33
    $region32: #{tpu_custom_call.1} parent=1 // pred_region
      %70 = dma.done [#allocation6], 1024
    $region33: #{tpu_custom_call.1} parent=1 // pred_fallthru
      _
    // Predicated region
    $region34: #{tpu_custom_call.1} parent=1 // pred_check
      _
    $region35: #{tpu_custom_call.1} parent=1 // pred_check_branch
      %72 = sbr.rel (0) target = $region37
    $region36: #{tpu_custom_call.1} parent=1 // pred_region
      %73 = dma.done [#allocation6], 256
    $region37: #{tpu_custom_call.1} parent=1 // pred_fallthru
      _
    // Predicated region
    $region38: #{tpu_custom_call.1} parent=1 // pred_check
      _
    $region39: #{tpu_custom_call.1} parent=1 // pred_check_branch
      %75 = sbr.rel (0) target = $region41
    $region40: #{tpu_custom_call.1} parent=1 // pred_region
      %76 = dma.done [#allocation9], 256
    $region41: #{tpu_custom_call.1} parent=1 // pred_fallthru
      _
    %v78 = vld [vmem:[#allocation2] sm:$0xff]
    %v79 = vpack.c.bf16 %v78, %v78
    %v80 = vld [vmem:[#allocation5] sm:$0xff]
    %v81 = vld [vmem:[#allocation5 + $0x8] sm:$0xff]
    %v82 = vld [vmem:[#allocation5 + $0x10] sm:$0xff]
    %v83 = vld [vmem:[#allocation5 + $0x18] sm:$0xff]
    %v84 = vld [vmem:[#allocation5 + $0x20] sm:$0xff]
    %v85 = vld [vmem:[#allocation5 + $0x28] sm:$0xff]
    %v86 = vld [vmem:[#allocation5 + $0x30] sm:$0xff]
    %v87 = vld [vmem:[#allocation5 + $0x38] sm:$0xff]
    %v88 = vpack.c.bf16 %v80, %v80
    %v89 = vpack.c.bf16 %v81, %v81
    %v90 = vpack.c.bf16 %v82, %v82
    %v91 = vpack.c.bf16 %v83, %v83
    %v92 = vpack.c.bf16 %v84, %v84
    %v93 = vpack.c.bf16 %v85, %v85
    %v94 = vpack.c.bf16 %v86, %v86
    %v95 = vpack.c.bf16 %v87, %v87
    %v96 = vld [vmem:[#allocation7] sm:$0xf]
    %v97 = vld [vmem:[#allocation7 + $0x4] sm:$0xf]
    %v98 = vld [vmem:[#allocation7 + $0x8] sm:$0xf]
    %v99 = vld [vmem:[#allocation7 + $0xc] sm:$0xf]
    %v100 = vld [vmem:[#allocation8] sm:$0xf]
    %v101 = vld [vmem:[#allocation8 + $0x4] sm:$0xf]
    %v102 = vld [vmem:[#allocation8 + $0x8] sm:$0xf]
    %v103 = vld [vmem:[#allocation8 + $0xc] sm:$0xf]
    %v104 = vld [vmem:[%s4] sm:$0x1]
    %v105 = vld [vmem:[%s5] sm:$0x1]
    %v107 = vlaneseq
    %v108 = vshrl.u32 %v107, 7
    %v109 = vsub.s32 0, %v108
    %v110 = vrot.slane %v104, %v109
    %v116 = vunpack.c.l.b16 %v96
    %v117 = vunpack.c.l.b16 %v97
    %v118 = vunpack.c.l.b16 %v98
    %v119 = vunpack.c.l.b16 %v99
    %v120 = vpack.c.b16 %v117, %v116
    %v121 = vpack.c.b16 %v119, %v118
    %vm124 = vcmask 261120
    %v126 = vsel %vm124, %v79, 0
    %128 = vmatprep.subr.bf16.mxu0 0
    %129 = vmatpush1.bf16.msra.mxu0 %v120
    %130 = vmatprep.subr.bf16.mxu0 0
    %131 = vmatpush1.bf16.msra.mxu0 %v121
    %132 = vmatprep.subr.bf16.mxu0 0
    %133 = vmatpush1.bf16.msra.mxu0 0
    %134 = vmatprep.subr.bf16.mxu0 0
    %135 = vmatpush1.bf16.msra.mxu0 0
    %136 = vmatprep.subr.bf16.mxu0 0
    %137 = vmatpush1.bf16.msra.mxu0 0
    %138 = vmatprep.subr.bf16.mxu0 0
    %139 = vmatpush1.bf16.msra.mxu0 0
    %140 = vmatprep.subr.bf16.mxu0 0
    %141 = vmatpush1.bf16.msra.mxu0 0
    %142 = vmatprep.subr.bf16.mxu0 0
    %143 = vmatpush1.bf16.msra.mxu0 0
    %144 = vmatprep.subr.bf16.mxu0 0
    %145 = vmatpush1.bf16.msra.mxu0 0
    %146 = vmatprep.subr.bf16.mxu0 0
    %147 = vmatpush1.bf16.msra.mxu0 0
    %148 = vmatprep.subr.bf16.mxu0 0
    %149 = vmatpush1.bf16.msra.mxu0 0
    %150 = vmatprep.subr.bf16.mxu0 0
    %151 = vmatpush1.bf16.msra.mxu0 0
    %152 = vmatprep.subr.bf16.mxu0 0
    %153 = vmatpush1.bf16.msra.mxu0 0
    %154 = vmatprep.subr.bf16.mxu0 0
    %155 = vmatpush1.bf16.msra.mxu0 0
    %156 = vmatprep.subr.bf16.mxu0 0
    %157 = vmatpush1.bf16.msra.mxu0 0
    %158 = vmatprep.subr.bf16.mxu0 0
    %159 = vmatpush1.bf16.msra.mxu0 0
    %160 = vmatprep.mubr.bf16.mxu0 0
    %161 = vmatmul.mubr.bf16.gmra.mrb[0].mxu0 %v126
    %v162 = vpop.f32.mrb[0].mxu0
    %v163 = vadd.f32 %v110, %v162
    %v164 = vpop.f32.mrb[0].mxu0
    %v165 = vpop.f32.mrb[0].mxu0
    %v166 = vpop.f32.mrb[0].mxu0
    %167 = vdwg.mxu0
    %v176 = vunpack.c.l.b16 %v88
    %v177 = vunpack.c.l.b16 %v89
    %v178 = vunpack.c.l.b16 %v90
    %v179 = vunpack.c.l.b16 %v91
    %v180 = vunpack.c.l.b16 %v92
    %v181 = vunpack.c.l.b16 %v93
    %v182 = vunpack.c.l.b16 %v94
    %v183 = vunpack.c.l.b16 %v95
    %v184 = vpack.c.b16 %v177, %v176
    %v185 = vpack.c.b16 %v179, %v178
    %v186 = vpack.c.b16 %v181, %v180
    %v187 = vpack.c.b16 %v183, %v182
    %v192 = vunpack.c.l.b16 %v100
    %v193 = vunpack.c.l.b16 %v101
    %v194 = vunpack.c.l.b16 %v102
    %v195 = vunpack.c.l.b16 %v103
    %v196 = vpack.c.b16 %v193, %v192
    %v197 = vpack.c.b16 %v195, %v194
    %v201 = vsel %vm124, %v184, 0
    %v204 = vsel %vm124, %v185, 0
    %v207 = vsel %vm124, %v186, 0
    %v210 = vsel %vm124, %v187, 0
    %212 = vmatprep.subr.bf16.mxu0 0
    %213 = vmatpush1.bf16.msra.mxu0 %v196
    %214 = vmatprep.subr.bf16.mxu0 0
    %215 = vmatpush1.bf16.msra.mxu0 %v197
    %216 = vmatprep.subr.bf16.mxu0 0
    %217 = vmatpush1.bf16.msra.mxu0 0
    %218 = vmatprep.subr.bf16.mxu0 0
    %219 = vmatpush1.bf16.msra.mxu0 0
    %220 = vmatprep.subr.bf16.mxu0 0
    %221 = vmatpush1.bf16.msra.mxu0 0
    %222 = vmatprep.subr.bf16.mxu0 0
    %223 = vmatpush1.bf16.msra.mxu0 0
    %224 = vmatprep.subr.bf16.mxu0 0
    %225 = vmatpush1.bf16.msra.mxu0 0
    %226 = vmatprep.subr.bf16.mxu0 0
    %227 = vmatpush1.bf16.msra.mxu0 0
    %228 = vmatprep.subr.bf16.mxu0 0
    %229 = vmatpush1.bf16.msra.mxu0 0
    %230 = vmatprep.subr.bf16.mxu0 0
    %231 = vmatpush1.bf16.msra.mxu0 0
    %232 = vmatprep.subr.bf16.mxu0 0
    %233 = vmatpush1.bf16.msra.mxu0 0
    %234 = vmatprep.subr.bf16.mxu0 0
    %235 = vmatpush1.bf16.msra.mxu0 0
    %236 = vmatprep.subr.bf16.mxu0 0
    %237 = vmatpush1.bf16.msra.mxu0 0
    %238 = vmatprep.subr.bf16.mxu0 0
    %239 = vmatpush1.bf16.msra.mxu0 0
    %240 = vmatprep.subr.bf16.mxu0 0
    %241 = vmatpush1.bf16.msra.mxu0 0
    %242 = vmatprep.subr.bf16.mxu0 0
    %243 = vmatpush1.bf16.msra.mxu0 0
    %244 = vmatprep.mubr.bf16.mxu0 0
    %245 = vmatmul.mubr.bf16.gmra.mrb[0].mxu0 %v201
    %v246 = vpop.f32.mrb[0].mxu0
    %v247 = vadd.f32 0.0, %v246
    %v248 = vpop.f32.mrb[0].mxu0
    %v249 = vpop.f32.mrb[0].mxu0
    %v250 = vadd.f32 0.0, %v249
    %v251 = vpop.f32.mrb[0].mxu0
    %252 = vmatprep.mubr.bf16.mxu0 0
    %253 = vmatmul.mubr.bf16.gmra.mrb[0].mxu0 %v204
    %v254 = vpop.f32.mrb[0].mxu0
    %v255 = vadd.f32 0.0, %v254
    %v256 = vpop.f32.mrb[0].mxu0
    %v257 = vpop.f32.mrb[0].mxu0
    %v258 = vadd.f32 0.0, %v257
    %v259 = vpop.f32.mrb[0].mxu0
    %260 = vmatprep.mubr.bf16.mxu0 0
    %261 = vmatmul.mubr.bf16.gmra.mrb[0].mxu0 %v207
    %v262 = vpop.f32.mrb[0].mxu0
    %v263 = vadd.f32 0.0, %v262
    %v264 = vpop.f32.mrb[0].mxu0
    %v265 = vpop.f32.mrb[0].mxu0
    %v266 = vadd.f32 0.0, %v265
    %v267 = vpop.f32.mrb[0].mxu0
    %268 = vmatprep.mubr.bf16.mxu0 0
    %269 = vmatmul.mubr.bf16.gmra.mrb[0].mxu0 %v210
    %v270 = vpop.f32.mrb[0].mxu0
    %v271 = vadd.f32 0.0, %v270
    %v272 = vpop.f32.mrb[0].mxu0
    %v273 = vpop.f32.mrb[0].mxu0
    %v274 = vadd.f32 0.0, %v273
    %v275 = vpop.f32.mrb[0].mxu0
    %276 = vdwg.mxu0
    %v277 = vadd.f32 %v247, %v163
    %v278 = vadd.f32 %v250, %v163
    %v279 = vadd.f32 %v255, %v163
    %v280 = vadd.f32 %v258, %v163
    %v281 = vadd.f32 %v263, %v163
    %v282 = vadd.f32 %v266, %v163
    %v283 = vadd.f32 %v271, %v163
    %v284 = vadd.f32 %v274, %v163
    %v285 = vtanh.pop %v277
    %v286 = vtanh.pop %v278
    %v287 = vtanh.pop %v279
    %v288 = vtanh.pop %v280
    %v289 = vtanh.pop %v281
    %v290 = vtanh.pop %v282
    %v291 = vtanh.pop %v283
    %v292 = vtanh.pop %v284
    %v294 = vlaneseq
    %v295 = vshrl.u32 %v294, 7
    %v296 = vsub.s32 0, %v295
    %v297 = vrot.slane %v105, %v296
    %v299 = vmul.f32 %v285, %v297
    %v300 = vmul.f32 %v286, %v297
    %v301 = vmul.f32 %v287, %v297
    %v302 = vmul.f32 %v288, %v297
    %v303 = vmul.f32 %v289, %v297
    %v304 = vmul.f32 %v290, %v297
    %v305 = vmul.f32 %v291, %v297
    %v306 = vmul.f32 %v292, %v297
    %v307 = vsel %vm124, %v299, 0.0
    %308 = vadd.xlane.f32.xlu0 %v307
    %v309 = vpop.xlane.xlu0 %308
    %v310 = vsel %vm124, %v300, 0.0
    %311 = vadd.xlane.f32.xlu0 %v310
    %v312 = vpop.xlane.xlu0 %311
    %v313 = vsel %vm124, %v301, 0.0
    %314 = vadd.xlane.f32.xlu0 %v313
    %v315 = vpop.xlane.xlu0 %314
    %v316 = vsel %vm124, %v302, 0.0
    %317 = vadd.xlane.f32.xlu0 %v316
    %v318 = vpop.xlane.xlu0 %317
    %v319 = vsel %vm124, %v303, 0.0
    %320 = vadd.xlane.f32.xlu0 %v319
    %v321 = vpop.xlane.xlu0 %320
    %v322 = vsel %vm124, %v304, 0.0
    %323 = vadd.xlane.f32.xlu0 %v322
    %v324 = vpop.xlane.xlu0 %323
    %v325 = vsel %vm124, %v305, 0.0
    %326 = vadd.xlane.f32.xlu0 %v325
    %v327 = vpop.xlane.xlu0 %326
    %v328 = vsel %vm124, %v306, 0.0
    %329 = vadd.xlane.f32.xlu0 %v328
    %v330 = vpop.xlane.xlu0 %329
    %v339 = vlaneseq
    %v340 = vand.u32 %v339, 127
    %v341 = vlaneseq
    %v342 = vshrl.u32 %v341, 7
    %v343 = vsub.s32 %v340, %v342
    %v344 = vrot.slane %v309, %v343
    %v345 = vlaneseq
    %v346 = vshrl.u32 %v345, 7
    %v347 = vsub.s32 %v340, %v346
    %v348 = vrot.slane %v312, %v347
    %v349 = vlaneseq
    %v350 = vshrl.u32 %v349, 7
    %v351 = vsub.s32 %v340, %v350
    %v352 = vrot.slane %v315, %v351
    %v353 = vlaneseq
    %v354 = vshrl.u32 %v353, 7
    %v355 = vsub.s32 %v340, %v354
    %v356 = vrot.slane %v318, %v355
    %v357 = vlaneseq
    %v358 = vshrl.u32 %v357, 7
    %v359 = vsub.s32 %v340, %v358
    %v360 = vrot.slane %v321, %v359
    %v361 = vlaneseq
    %v362 = vshrl.u32 %v361, 7
    %v363 = vsub.s32 %v340, %v362
    %v364 = vrot.slane %v324, %v363
    %v365 = vlaneseq
    %v366 = vshrl.u32 %v365, 7
    %v367 = vsub.s32 %v340, %v366
    %v368 = vrot.slane %v327, %v367
    %v369 = vlaneseq
    %v370 = vshrl.u32 %v369, 7
    %v371 = vsub.s32 %v340, %v370
    %v372 = vrot.slane %v330, %v371
    %vm373 = vcmask 1041409
    %v374 = vsel %vm373, %v348, %v344
    %vm375 = vcmask 1042434
    %v376 = vsel %vm375, %v352, %v374
    %vm377 = vcmask 1043459
    %v378 = vsel %vm377, %v356, %v376
    %vm379 = vcmask 1044484
    %v380 = vsel %vm379, %v360, %v378
    %vm381 = vcmask 1045509
    %v382 = vsel %vm381, %v364, %v380
    %vm383 = vcmask 1046534
    %v384 = vsel %vm383, %v368, %v382
    %vm385 = vcmask 1047559
    %v386 = vsel %vm385, %v372, %v384
    %388 = vxpose.xlu0.b32.start [1/16] %v386, 128
    %389 = vxpose.xlu0.b32.cont [2/16] 0.0, 128
    %390 = vxpose.xlu0.b32.cont [3/16] 0.0, 128
    %391 = vxpose.xlu0.b32.cont [4/16] 0.0, 128
    %392 = vxpose.xlu0.b32.cont [5/16] 0.0, 128
    %393 = vxpose.xlu0.b32.cont [6/16] 0.0, 128
    %394 = vxpose.xlu0.b32.cont [7/16] 0.0, 128
    %395 = vxpose.xlu0.b32.cont [8/16] 0.0, 128
    %396 = vxpose.xlu0.b32.cont [9/16] 0.0, 128
    %397 = vxpose.xlu0.b32.cont [10/16] 0.0, 128
    %398 = vxpose.xlu0.b32.cont [11/16] 0.0, 128
    %399 = vxpose.xlu0.b32.cont [12/16] 0.0, 128
    %400 = vxpose.xlu0.b32.cont [13/16] 0.0, 128
    %401 = vxpose.xlu0.b32.cont [14/16] 0.0, 128
    %402 = vxpose.xlu0.b32.cont [15/16] 0.0, 128
    %403 = vxpose.xlu0.b32.end [16/16] 0.0, 128
    %v404 = vpop.trf.xlu0
    %v405 = vpop.trf.xlu0
    %v406 = vpop.trf.xlu0
    %v407 = vpop.trf.xlu0
    %v408 = vpop.trf.xlu0
    %v409 = vpop.trf.xlu0
    %v410 = vpop.trf.xlu0
    %v411 = vpop.trf.xlu0
    %v412 = vpop.trf.xlu0
    %v413 = vpop.trf.xlu0
    %v414 = vpop.trf.xlu0
    %v415 = vpop.trf.xlu0
    %v416 = vpop.trf.xlu0
    %v417 = vpop.trf.xlu0
    %v418 = vpop.trf.xlu0
    %v419 = vpop.trf.xlu0
    %vm420 = vcmask 64512
    %v421 = vsel %vm420, %v404, -inf
    %422 = vmax.xlane.f32.xlu0 %v421
    %v423 = vpop.xlane.xlu0 %422
    %v424 = vsub.f32 %v404, %v423
    %v425 = vmul.f32 %v424, 1.442695
    %v426 = vpow.pop %v425
    %v427 = vsel %vm420, %v426, 0.0
    %428 = vadd.xlane.f32.xlu0 %v427
    %v429 = vpop.xlane.xlu0 %428
    %v430 = vrcp.pop %v429
    %v431 = vmul.f32 1.0, %v430
    %v432 = vmul.f32 %v426, %v431
    %433 = vst.msk [vmem:[#allocation10] sm:$0xff] %vm420, %v432
    // Predicated region
    $region42: #{tpu_custom_call.1} parent=1 // pred_check
      _
    $region43: #{tpu_custom_call.1} parent=1 // pred_check_branch
      %435 = sbr.rel (0) target = $region45
    $region44: #{tpu_custom_call.1} parent=1 // pred_region
      %s437 = ssub.s32 128, 128
      %438 = vsyncadd [#allocation4], %s437
      %s440 = sshll.u32 [#allocation10], 4
      %s441 = int_to_ptr.vmem [resolvable:$true] %s440
      %443 = dma.vmem_to_hbm [thread:$0]  %s441, 128, %s6, [#allocation4]
    $region45: #{tpu_custom_call.1} parent=1 // pred_fallthru
      _
    // Predicated region
    $region46: #{tpu_custom_call.1} parent=1 // pred_check
      _
    $region47: #{tpu_custom_call.1} parent=1 // pred_check_branch
      %445 = sbr.rel (0) target = $region49
    $region48: #{tpu_custom_call.1} parent=1 // pred_region
      %446 = dma.done [#allocation4], 128
    $region49: #{tpu_custom_call.1} parent=1 // pred_fallthru
      _
    %447 = vsyncpa [#allocation3], 1
    %448 = vsyncpa [#allocation6], 1
    %449 = vsyncpa [#allocation9], 1
    %450 = vsyncpa [#allocation4], 1

</llo_original>
